<compile_context>
chip_gen: v6e
topology: v6e:2x2x1
jax: 0.10.0
libtpu: 0.0.40
codegen_flags: <defaults>
</compile_context>

<pallas_src>
import functools

import jax
import jax.numpy as jnp
from jax.experimental import pallas as pl
from jax.experimental.pallas import tpu as pltpu


def _pe_kernel(seed_ref, x_ref, pe_ref, o_ref, *, dropout_p, training, seq_len):
    # x_ref: (B, ts, D)   pe_ref: (1, ts, D)   o_ref: (B, ts, D)
    y = x_ref[...].astype(jnp.float32) + pe_ref[...].astype(jnp.float32)

    if training and dropout_p > 0.0:
        # TODO(synk): cannot reproduce PyTorch's exact RNG stream; semantics only
        # (per-element Bernoulli keep with prob 1-p, inverted-dropout scaling).
        B, ts, D = x_ref.shape
        s0 = pl.program_id(0) * ts  # absolute sequence offset of this tile

        # Absolute element coordinates -> tiling-invariant mask.
        b_idx = jax.lax.broadcasted_iota(jnp.int32, (B, ts, D), 0)
        s_idx = jax.lax.broadcasted_iota(jnp.int32, (B, ts, D), 1) + s0
        d_idx = jax.lax.broadcasted_iota(jnp.int32, (B, ts, D), 2)
        lin = (b_idx * seq_len + s_idx) * D + d_idx

        # Counter-based hash (plain VPU integer ops; no TPU-only primitives).
        z = lin.astype(jnp.uint32) + seed_ref[0].astype(jnp.uint32) * jnp.uint32(0x9E3779B9)
        for _ in range(2):  # two rounds of a 32-bit finalizer (unrolled at trace time)
            z = z ^ (z >> 16)
            z = z * jnp.uint32(0x7FEB352D)
            z = z ^ (z >> 15)
            z = z * jnp.uint32(0x846CA68B)
            z = z ^ (z >> 16)

        # Integer threshold compare: keep with probability (1 - p).
        threshold = jnp.uint32(min(int(round(dropout_p * (1 << 32))), (1 << 32) - 1))
        keep = z >= threshold
        y = jnp.where(keep, y * jnp.float32(1.0 / (1.0 - dropout_p)), jnp.float32(0.0))

    o_ref[...] = y.astype(o_ref.dtype)


def make_pe_table(model_dim, max_len=5000, dtype=jnp.float32):
    position = jnp.arange(max_len, dtype=jnp.float32)[:, None]            # (L, 1)
    div_term = jnp.exp(
        jnp.arange(0, model_dim, 2, dtype=jnp.float32)
        * (-jnp.log(jnp.float32(10000.0)) / model_dim)
    )                                                                      # (D/2,)
    sin = jnp.sin(position * div_term)                                     # (L, D/2)
    cos = jnp.cos(position * div_term)                                     # (L, D/2)
    pe = jnp.stack([sin, cos], axis=-1).reshape(max_len, model_dim)        # interleave
    return pe[:, None, :].astype(dtype)                                    # (L, 1, D)


def _pick_seq_tile(seq_len, row_bytes, target_bytes=1 << 20):
    """Largest seq tile whose (B, ts, D) block stays ~<= target_bytes.

    Keeps 2x-double-buffered 2-in/1-out resident footprint well under the
    scoped-VMEM defaults on v5e (16 MiB) / v6e (32 MiB) / v7x (32 of 64 MiB),
    while staying big enough that the ~0.35 us/grid-step overhead is amortized.
    Prefers multiples of 8 (sublane-aligned) that divide seq_len exactly.
    """
    cap = max(1, target_bytes // max(row_bytes, 1))
    if seq_len <= cap:
        return seq_len
    divs = [d for d in range(1, seq_len + 1) if seq_len % d == 0 and d <= cap]
    mult8 = [d for d in divs if d % 8 == 0]
    return (mult8 or divs)[-1]


def positional_encoding(x, pe, *, dropout_p=0.1, training=False, seed=0, seq_tile=None):
    """x: (S, B, D); pe: (max_len, 1, D).  Returns (S, B, D), same dtype as x."""
    S, B, D = x.shape
    assert pe.shape[0] >= S and pe.shape[2] == D

    # Layout plumbing: put (seq, model_dim) on the (sublane, lane) axes.
    xt = jnp.transpose(x, (1, 0, 2))            # (B, S, D)
    pe_t = jnp.transpose(pe[:S], (1, 0, 2))     # (1, S, D)

    itemsize = jnp.dtype(x.dtype).itemsize
    ts = seq_tile or _pick_seq_tile(S, B * D * itemsize)
    assert S % ts == 0, f"seq_tile {ts} must divide seq_len {S}"
    grid = (S // ts,)

    seed_arr = jnp.array([seed], dtype=jnp.int32)
    kernel = functools.partial(
        _pe_kernel,
        dropout_p=float(dropout_p),
        training=bool(training),
        seq_len=S,
    )

    out_t = pl.pallas_call(
        kernel,
        out_shape=jax.ShapeDtypeStruct((B, S, D), x.dtype),
        grid_spec=pltpu.PrefetchScalarGridSpec(
            num_scalar_prefetch=1,
            grid=grid,
            in_specs=[
                pl.BlockSpec((B, ts, D), lambda i, seed: (0, i, 0)),   # x
                pl.BlockSpec((1, ts, D), lambda i, seed: (0, i, 0)),   # pe (bcast over B)
            ],
            out_specs=pl.BlockSpec((B, ts, D), lambda i, seed: (0, i, 0)),
        ),
        compiler_params=pltpu.CompilerParams(
            # Mask depends only on absolute position -> safe to shard across
            # TensorCores (v7x megacore); harmless no-op on v5e/v6e.
            dimension_semantics=("parallel",),
        ),
        # In-place update: output reuses x's HBM buffer (index 1 = x, after the
        # scalar-prefetch seed at index 0).
        input_output_aliases={1: 0},
    )(seed_arr, xt, pe_t)

    return jnp.transpose(out_t, (1, 0, 2))      # back to (S, B, D)


if __name__ == "__main__":
    seq_len, batch, model_dim = 8, 2, 32
    max_len = 64

    key = jax.random.PRNGKey(0)
    x = jax.random.normal(key, (seq_len, batch, model_dim), dtype=jnp.float32)
    pe = make_pe_table(model_dim, max_len=max_len)

    # Eval mode (dropout = identity): must match x + pe[:S] exactly.
    out_eval = positional_encoding(x, pe, dropout_p=0.1, training=False)
    out_eval = jax.block_until_ready(out_eval)
    ref = x + pe[:seq_len]
    assert out_eval.shape == (seq_len, batch, model_dim)
    assert jnp.allclose(out_eval, ref, atol=1e-6), "eval-mode mismatch"

    # Training mode: every element must be either dropped (0) or kept and
    # scaled by 1/(1-p); keep fraction should be roughly 1-p.
    p = 0.1
    out_train = positional_encoding(x, pe, dropout_p=p, training=True, seed=42)
    out_train = jax.block_until_ready(out_train)
    assert out_train.shape == (seq_len, batch, model_dim)
    scaled = ref / (1.0 - p)
    is_drop = jnp.isclose(out_train, 0.0, atol=1e-6)
    is_keep = jnp.isclose(out_train, scaled, atol=1e-5)
    assert bool(jnp.all(is_drop | is_keep)), "train-mode value mismatch"
    keep_frac = float(jnp.mean(is_keep.astype(jnp.float32)))
    assert 0.5 < keep_frac < 1.0, f"implausible keep fraction {keep_frac}"

    print("KERNEL_OK")
</pallas_src>

<mosaic_0001>
module attributes {stable_mosaic.version = 11 : i64} {
  func.func @_pe_kernel(%arg0: i32, %arg1: memref<1xi32, #tpu.memory_space<smem>>, %arg2: memref<2x8x32xf32, #tpu.memory_space<vmem>>, %arg3: memref<1x8x32xf32, #tpu.memory_space<vmem>>, %arg4: memref<2x8x32xf32, #tpu.memory_space<vmem>>) attributes {dimension_semantics = [#tpu.dimension_semantics<parallel>], iteration_bounds = array<i64: 1>, scalar_prefetch = 1 : i64, scratch_operands = 0 : i64, tpu.core_type = #tpu.core_type<tc>, window_params = [{transform_indices = @transform_0, window_bounds = array<i64: 2, 8, 32>}, {transform_indices = @transform_1, window_bounds = array<i64: 1, 8, 32>}, {transform_indices = @transform_2, window_bounds = array<i64: 2, 8, 32>}]} {
    %c0 = arith.constant 0 : index
    %c0_0 = arith.constant 0 : index
    %c0_1 = arith.constant 0 : index
    %0 = vector.load %arg2[%c0, %c0_0, %c0_1] : memref<2x8x32xf32, #tpu.memory_space<vmem>>, vector<2x8x32xf32>
    %c0_2 = arith.constant 0 : index
    %c0_3 = arith.constant 0 : index
    %c0_4 = arith.constant 0 : index
    %1 = vector.load %arg3[%c0_2, %c0_3, %c0_4] : memref<1x8x32xf32, #tpu.memory_space<vmem>>, vector<1x8x32xf32>
    %2 = vector.broadcast %1 : vector<1x8x32xf32> to vector<2x8x32xf32>
    %3 = arith.addf %0, %2 : vector<2x8x32xf32>
    %c0_5 = arith.constant 0 : index
    %c0_6 = arith.constant 0 : index
    %c0_7 = arith.constant 0 : index
    %4 = vector.load %arg4[%c0_5, %c0_6, %c0_7] : memref<2x8x32xf32, #tpu.memory_space<vmem>>, vector<2x8x32xf32>
    tpu.vector_store %arg4[%c0_5, %c0_6, %c0_7], %3 {strides = array<i32>} : memref<2x8x32xf32, #tpu.memory_space<vmem>>, vector<2x8x32xf32>,
    return
  }
  func.func @transform_0(%arg0: i32, %arg1: memref<1xi32, #tpu.memory_space<smem>>) -> (i32, i32, i32) {
    %c0_i32 = arith.constant 0 : i32
    %c0_i32_0 = arith.constant 0 : i32
    %c0_i32_1 = arith.constant 0 : i32
    return %c0_i32, %arg0, %c0_i32_0 : i32, i32, i32
  }
  func.func @transform_1(%arg0: i32, %arg1: memref<1xi32, #tpu.memory_space<smem>>) -> (i32, i32, i32) {
    %c0_i32 = arith.constant 0 : i32
    %c0_i32_0 = arith.constant 0 : i32
    %c0_i32_1 = arith.constant 0 : i32
    return %c0_i32, %arg0, %c0_i32_0 : i32, i32, i32
  }
  func.func @transform_2(%arg0: i32, %arg1: memref<1xi32, #tpu.memory_space<smem>>) -> (i32, i32, i32) {
    %c0_i32 = arith.constant 0 : i32
    %c0_i32_0 = arith.constant 0 : i32
    %c0_i32_1 = arith.constant 0 : i32
    return %c0_i32, %arg0, %c0_i32_0 : i32, i32, i32
  }
}

</mosaic_0001>

<llo_original>
// kernel: tpu_custom_call.1
$region0: #{tpu_custom_call.1}
  #allocation0 [shape = 'u32[]', space=smem, size = 0x4, offset = 0x4, fixed_abs, tag = 'smem constant byte address 0x4 - core index']
  #allocation1 [shape = 'u32[144,128]{1,0:T(1,128)}', space=vmem, size = 0x12000, scoped, tag = 'internal scratch']
  #allocation2 [shape = 's32[1]{0}', space=sflag, size = 0x4, scoped, tag = 'scoped memory for tpu_custom_call.1']
  #allocation3 [shape = 's32[1]{0:T(128)S(6)}', space=smem, size = 0x200, scoped, tag = 'prefetched SMEM operand 0']
  %s0 = inlined_call_operand.<no memory space> [shape: s32[1], index: 0, kind: input, shape index: {}]
  %s1 = inlined_call_operand.hbm [shape: f32[2,8,32], index: 1, kind: input, shape index: {}, may-alias: {1,3}]
  %s2 = inlined_call_operand.vmem [shape: f32[1,8,32], index: 2, kind: input, shape index: {}]
  %s3 = inlined_call_operand.hbm [shape: f32[2,8,32], index: 3, kind: output, shape index: {}, may-alias: {1,3}]
  %s4 = sld [smem:[#allocation0]]
  $region22: #{tpu_custom_call.1} parent=0
    _
  %s6 = ssub.s32 1, %s4
  %s7 = scalar_select 0, %s6, %s4
  %8 = sst [smem:[#allocation3]] %s0
  $region1: #{tpu_custom_call.1} parent=0
    #allocation4 [shape = 'u8[8192]{0}', space=vmem, size = 0x2000, scoped, tag = 'input window, operand 1, single buffered']
    #allocation5 [shape = 's32[1]{0}', space=sflag, size = 0x4, scoped, tag = 'scoped memory for tpu_custom_call.1']
    #allocation6 [shape = 's32[1]{0}', space=sflag, size = 0x4, scoped, tag = 'scoped memory for tpu_custom_call.1']
    #allocation7 [shape = 'u8[8192]{0}', space=vmem, size = 0x2000, scoped, tag = 'output window, operand 0, single buffered']
    %9 = vsyncpa [#allocation5], 0
    %10 = vsyncpa [#allocation6], 0
    // Predicated region
    $region2: #{tpu_custom_call.1} parent=1 // pred_check
      _
    $region3: #{tpu_custom_call.1} parent=1 // pred_check_branch
      %12 = sbr.rel (0) target = $region5
    $region4: #{tpu_custom_call.1} parent=1 // pred_region
      %s14 = ssub.s32 256, 256
      %15 = vsyncadd [#allocation5], %s14
      %s16 = sshll.u32 [#allocation4], 4
      %s17 = int_to_ptr.vmem [resolvable:$true] %s16
      %22 = dma.hbm_to_vmem [thread:$0]  %s1, 256, %s17, [#allocation5], 128, 128, 8
    $region5: #{tpu_custom_call.1} parent=1 // pred_fallthru
      _
    // Predicated region
    $region6: #{tpu_custom_call.1} parent=1 // pred_check
      _
    $region7: #{tpu_custom_call.1} parent=1 // pred_check_branch
      %24 = sbr.rel (0) target = $region9
    $region8: #{tpu_custom_call.1} parent=1 // pred_region
      _
    $region9: #{tpu_custom_call.1} parent=1 // pred_fallthru
      _
    // Predicated region
    $region10: #{tpu_custom_call.1} parent=1 // pred_check
      _
    $region11: #{tpu_custom_call.1} parent=1 // pred_check_branch
      %26 = sbr.rel (0) target = $region13
    $region12: #{tpu_custom_call.1} parent=1 // pred_region
      %27 = dma.done [#allocation5], 256
    $region13: #{tpu_custom_call.1} parent=1 // pred_fallthru
      _
    %v28 = vld [vmem:[#allocation4] sm:$0xff]
    %v29 = vld [vmem:[#allocation4 + $0x8] sm:$0xff]
    %v30 = vld [vmem:[%s2] sm:$0xff]
    %v31 = vadd.f32 %v28, %v30
    %v32 = vadd.f32 %v29, %v30
    %vm33 = vcmask 261120
    %34 = vst.msk [vmem:[#allocation7] sm:$0xff] %vm33, %v31
    %35 = vst.msk [vmem:[#allocation7 + $0x8] sm:$0xff] %vm33, %v32
    // Predicated region
    $region14: #{tpu_custom_call.1} parent=1 // pred_check
      _
    $region15: #{tpu_custom_call.1} parent=1 // pred_check_branch
      %37 = sbr.rel (0) target = $region17
    $region16: #{tpu_custom_call.1} parent=1 // pred_region
      %s39 = ssub.s32 256, 256
      %40 = vsyncadd [#allocation6], %s39
      %s41 = sshll.u32 [#allocation7], 4
      %s42 = int_to_ptr.vmem [resolvable:$true] %s41
      %47 = dma.vmem_to_hbm [thread:$0]  %s42, 256, %s3, [#allocation6], 128, 128, 8
    $region17: #{tpu_custom_call.1} parent=1 // pred_fallthru
      _
    // Predicated region
    $region18: #{tpu_custom_call.1} parent=1 // pred_check
      _
    $region19: #{tpu_custom_call.1} parent=1 // pred_check_branch
      %49 = sbr.rel (0) target = $region21
    $region20: #{tpu_custom_call.1} parent=1 // pred_region
      %50 = dma.done [#allocation6], 256
    $region21: #{tpu_custom_call.1} parent=1 // pred_fallthru
      _
    %51 = vsyncpa [#allocation5], 1
    %52 = vsyncpa [#allocation6], 1

</llo_original>
